<compile_context>
chip_gen: v6e
topology: v6e:2x2x1
jax: 0.10.0
libtpu: 0.0.40
codegen_flags: <defaults>
</compile_context>

<pallas_src>
import jax
import jax.numpy as jnp
from jax.experimental import pallas as pl
from jax.experimental.pallas import tpu as pltpu

# ----------------------------- configuration -----------------------------
SCALE_FACTOR = 0.13025
B = 1          # the reference slices e2[0:1] / e2[1:2], so latent batch is 1
C = 4
H = 16
W = 16
HW = H * W     # 256 -> lane-dense last dim
HIDDEN = 32
CTX_DIM = 32
ADM_DIM = 16
SEQ = 8


# ----------------------------- schedule (glue) -----------------------------
def make_beta_schedule(timesteps, linear_start=0.00085, linear_end=0.012):
    # "linear" beta schedule as used by Stable Diffusion.
    return jnp.linspace(linear_start ** 0.5, linear_end ** 0.5, timesteps,
                        dtype=jnp.float32) ** 2


def register_schedule(timesteps=1000, linear_start=0.00085, linear_end=0.012):
    betas = make_beta_schedule(timesteps, linear_start, linear_end)
    alphas = 1.0 - betas
    alphas_cumprod = jnp.cumprod(alphas, axis=0)
    sigmas = ((1.0 - alphas_cumprod) / alphas_cumprod) ** 0.5
    log_sigmas = jnp.log(sigmas)
    return sigmas, log_sigmas


def get_karras_sigmas(n, sigma_min=0.0291675, sigma_max=14.614642, rho=7.0):
    ramp = jnp.linspace(0.0, 1.0, n, dtype=jnp.float32)
    min_inv_rho = sigma_min ** (1.0 / rho)
    max_inv_rho = sigma_max ** (1.0 / rho)
    sigmas = (max_inv_rho + ramp * (min_inv_rho - max_inv_rho)) ** rho
    return jnp.concatenate([sigmas, jnp.zeros((1,), jnp.float32)])


def set_steps(steps, denoise=1.0):
    if denoise > 0.9999:
        return get_karras_sigmas(steps)
    denoise = max(0.01, denoise)
    new_steps = int(steps / denoise)
    sigmas = get_karras_sigmas(new_steps)
    return sigmas[-(steps + 1):]


# ----------------------------- fused sampler kernel -----------------------------
def _sampler_kernel(step_ref, glob_ref, lat_ref, noise0_ref, noise_ref,
                    cond_ref, w1t_ref, b1t_ref, w2t_ref, b2t_ref,
                    out_ref, x_vmem):
    """One grid iteration == one euler-ancestral step.  Latent resident in VMEM."""
    i = pl.program_id(0)

    cond_scale = glob_ref[0]
    noise_mult = glob_ref[1]
    scale_in = glob_ref[2]       # scale_factor   (process_latent_in)
    scale_out = glob_ref[3]      # 1/scale_factor (process_latent_out)

    # prepare_noise + process_latent_in fused at step 0:
    #   x = latent * scale_factor + noise * noise_mult
    @pl.when(i == 0)
    def _():
        x_vmem[...] = lat_ref[...] * scale_in + noise0_ref[...] * noise_mult

    sigma = step_ref[i, 0]
    sigma_down = step_ref[i, 1]
    sigma_up = step_ref[i, 2]
    c_in = step_ref[i, 3]
    c_out = step_ref[i, 4]
    c_noise = step_ref[i, 5]     # sigma_to_t(sigma)

    x = x_vmem[...]                                              # (C, HW)

    # --- denoiser stand-in (per-pixel MLP, lane-dense (., HW) layout) ---
    # h0 is identical for both CFG branches (x2 = cat(x*c_in, x*c_in)),
    # so the first matmul is computed once.
    h0 = jnp.dot(w1t_ref[...], x * c_in,
                 preferred_element_type=jnp.float32)             # (HIDDEN, HW)
    h0 = h0 + b1t_ref[...] + c_noise
    h_pos = jnp.maximum(h0 + cond_ref[:, 0:1], 0.0)
    h_neg = jnp.maximum(h0 + cond_ref[:, 1:2], 0.0)
    eps1 = jnp.dot(w2t_ref[...], h_pos,
                   preferred_element_type=jnp.float32) + b2t_ref[...]   # (C, HW)
    eps2 = jnp.dot(w2t_ref[...], h_neg,
                   preferred_element_type=jnp.float32) + b2t_ref[...]   # (C, HW)

    # --- CFG combination + denoised (reference formula) ---
    eps = eps2 + (eps1 - eps2) * cond_scale
    denoised = x + eps * c_out

    # --- euler ancestral update ---
    d = (x - denoised) / sigma
    x_new = x + d * (sigma_down - sigma) + noise_ref[...] * sigma_up
    x_vmem[...] = x_new

    # process_latent_out folded into the write-out; output block index is
    # constant so HBM writeback happens once, after the final step.
    out_ref[...] = x_new * scale_out


def run_sampler(step_tab, glob, lat, noise0, step_noise, cond2_t,
                w1t, b1t, w2t, b2t):
    n_steps = step_tab.shape[0]
    return pl.pallas_call(
        _sampler_kernel,
        out_shape=jax.ShapeDtypeStruct((C, HW), jnp.float32),
        grid=(n_steps,),
        in_specs=[
            pl.BlockSpec(memory_space=pltpu.MemorySpace.SMEM),   # step scalars
            pl.BlockSpec(memory_space=pltpu.MemorySpace.SMEM),   # global scalars
            pl.BlockSpec((C, HW), lambda i: (0, 0)),             # latent
            pl.BlockSpec((C, HW), lambda i: (0, 0)),             # init noise
            pl.BlockSpec((None, C, HW), lambda i: (i, 0, 0)),    # per-step noise
            pl.BlockSpec((HIDDEN, 2), lambda i: (0, 0)),         # cond (pos|neg)
            pl.BlockSpec((HIDDEN, C), lambda i: (0, 0)),         # W1^T
            pl.BlockSpec((HIDDEN, 1), lambda i: (0, 0)),         # b1^T
            pl.BlockSpec((C, HIDDEN), lambda i: (0, 0)),         # W2^T
            pl.BlockSpec((C, 1), lambda i: (0, 0)),              # b2^T
        ],
        out_specs=pl.BlockSpec((C, HW), lambda i: (0, 0)),
        scratch_shapes=[pltpu.VMEM((C, HW), jnp.float32)],       # resident latent
        compiler_params=pltpu.CompilerParams(
            dimension_semantics=("arbitrary",)),                 # sequential steps
    )(step_tab, glob, lat, noise0, step_noise, cond2_t, w1t, b1t, w2t, b2t)


# ----------------------------- forward (glue + one kernel) -----------------------------
def ksampler_forward(params, positive_tensor, negative_tensor, cond_scale,
                     latent_image, steps, denoise, seed, schedule_sigmas,
                     log_sigmas):
    # conditioning vector (pooled text context + adm) -- small glue projections,
    # done once per forward call (outside the sampler loop).
    def make_cond(ct):
        ctx = jnp.mean(ct["text_encoded"], axis=1)             # (1, CTX_DIM)
        return ctx @ params["wc"] + ct["adm"] @ params["wy"]   # (1, HIDDEN)

    cond2_t = jnp.concatenate([make_cond(positive_tensor),
                               make_cond(negative_tensor)], axis=0).T  # (HIDDEN, 2)

    sigmas = set_steps(steps, denoise)                         # (n_steps + 1,)
    n_steps = int(sigmas.shape[0]) - 1

    # prepare_noise
    key = jax.random.PRNGKey(seed)
    k0, k1 = jax.random.split(key)
    noise0 = jax.random.normal(k0, (C, HW), jnp.float32)
    step_noise = jax.random.normal(k1, (n_steps, C, HW), jnp.float32)
    if abs(float(schedule_sigmas[-1]) - float(sigmas[0])) < 1e-5:
        noise_mult = float(jnp.sqrt(1.0 + sigmas[0] ** 2))
    else:
        noise_mult = float(sigmas[0])

    # per-step scalar table: sigma, sigma_down, sigma_up, c_in, c_out, t
    sig = sigmas[:-1]
    sig_next = sigmas[1:]
    sigma_up = jnp.minimum(
        sig_next,
        jnp.sqrt(sig_next ** 2 * (sig ** 2 - sig_next ** 2) / sig ** 2))
    sigma_down = jnp.sqrt(sig_next ** 2 - sigma_up ** 2)
    c_in = 1.0 / jnp.sqrt(sig ** 2 + 1.0)
    c_out = -sig
    t = jnp.argmin(jnp.abs(jnp.log(sig)[:, None] - log_sigmas[None, :]),
                   axis=1).astype(jnp.float32)                 # sigma_to_t (argmin)
    step_tab = jnp.stack([sig, sigma_down, sigma_up, c_in, c_out, t],
                         axis=1).astype(jnp.float32)           # (n_steps, 6)

    glob = jnp.array([cond_scale, noise_mult, SCALE_FACTOR, 1.0 / SCALE_FACTOR],
                     jnp.float32)

    # NCHW with B=1 is already (C, H*W)-contiguous: pure reshape, no transpose.
    lat = latent_image.reshape(C, HW)

    out = run_sampler(step_tab, glob, lat, noise0, step_noise, cond2_t,
                      params["w1t"], params["b1t"],
                      params["w2t"], params["b2t"])
    return out.reshape(B, C, H, W)


# ----------------------------- parameters -----------------------------
def init_params():
    kp = jax.random.PRNGKey(42)
    k1, k2, k3, k4 = jax.random.split(kp, 4)
    return {
        # weights stored in the lane-dense (out_dim, in_dim) layout the kernel uses
        "w1t": 0.1 * jax.random.normal(k1, (HIDDEN, C), jnp.float32),
        "b1t": jnp.zeros((HIDDEN, 1), jnp.float32),
        "w2t": 0.1 * jax.random.normal(k2, (C, HIDDEN), jnp.float32),
        "b2t": jnp.zeros((C, 1), jnp.float32),
        "wc": 0.1 * jax.random.normal(k3, (CTX_DIM, HIDDEN), jnp.float32),
        "wy": 0.1 * jax.random.normal(k4, (ADM_DIM, HIDDEN), jnp.float32),
    }


# ----------------------------- main -----------------------------
if __name__ == "__main__":
    params = init_params()
    schedule_sigmas, log_sigmas = register_schedule()

    key = jax.random.PRNGKey(0)
    k_lat, k_tp, k_tn, k_ap, k_an = jax.random.split(key, 5)
    latent_image = jax.random.normal(k_lat, (B, C, H, W), jnp.float32)
    positive_tensor = {
        "text_encoded": jax.random.normal(k_tp, (1, SEQ, CTX_DIM), jnp.float32),
        "adm": jax.random.normal(k_ap, (1, ADM_DIM), jnp.float32),
    }
    negative_tensor = {
        "text_encoded": jax.random.normal(k_tn, (1, SEQ, CTX_DIM), jnp.float32),
        "adm": jax.random.normal(k_an, (1, ADM_DIM), jnp.float32),
    }

    out = ksampler_forward(
        params, positive_tensor, negative_tensor,
        cond_scale=7.5, latent_image=latent_image,
        steps=4, denoise=1.0, seed=0,
        schedule_sigmas=schedule_sigmas, log_sigmas=log_sigmas)
    out = jax.block_until_ready(out)

    assert out.shape == (B, C, H, W)
    assert bool(jnp.all(jnp.isfinite(out)))
    print("KERNEL_OK")
</pallas_src>

<mosaic_0001>
module attributes {stable_mosaic.version = 11 : i64} {
  func.func @_sampler_kernel(%arg0: i32, %arg1: memref<4x6xf32, #tpu.memory_space<smem>>, %arg2: memref<4xf32, #tpu.memory_space<smem>>, %arg3: memref<4x256xf32, #tpu.memory_space<vmem>>, %arg4: memref<4x256xf32, #tpu.memory_space<vmem>>, %arg5: memref<1x4x256xf32, #tpu.memory_space<vmem>>, %arg6: memref<32x2xf32, #tpu.memory_space<vmem>>, %arg7: memref<32x4xf32, #tpu.memory_space<vmem>>, %arg8: memref<32x1xf32, #tpu.memory_space<vmem>>, %arg9: memref<4x32xf32, #tpu.memory_space<vmem>>, %arg10: memref<4x1xf32, #tpu.memory_space<vmem>>, %arg11: memref<4x256xf32, #tpu.memory_space<vmem>>, %arg12: memref<4x256xf32, #tpu.memory_space<vmem>>) attributes {dimension_semantics = [#tpu.dimension_semantics<arbitrary>], iteration_bounds = array<i64: 4>, scalar_prefetch = 0 : i64, scratch_operands = 1 : i64, tpu.core_type = #tpu.core_type<tc>, window_params = [{transform_indices = @transform_0, window_bounds = array<i64: 4, 6>}, {transform_indices = @transform_1, window_bounds = array<i64: 4>}, {pipeline_mode = #tpu.pipeline_mode<synchronous>, transform_indices = @transform_2, window_bounds = array<i64: 4, 256>}, {pipeline_mode = #tpu.pipeline_mode<synchronous>, transform_indices = @transform_3, window_bounds = array<i64: 4, 256>}, {transform_indices = @transform_4, window_bounds = array<i64: 1, 4, 256>}, {pipeline_mode = #tpu.pipeline_mode<synchronous>, transform_indices = @transform_5, window_bounds = array<i64: 32, 2>}, {pipeline_mode = #tpu.pipeline_mode<synchronous>, transform_indices = @transform_6, window_bounds = array<i64: 32, 4>}, {pipeline_mode = #tpu.pipeline_mode<synchronous>, transform_indices = @transform_7, window_bounds = array<i64: 32, 1>}, {pipeline_mode = #tpu.pipeline_mode<synchronous>, transform_indices = @transform_8, window_bounds = array<i64: 4, 32>}, {pipeline_mode = #tpu.pipeline_mode<synchronous>, transform_indices = @transform_9, window_bounds = array<i64: 4, 1>}, {pipeline_mode = #tpu.pipeline_mode<synchronous>, transform_indices = @transform_10, window_bounds = array<i64: 4, 256>}]} {
    %c0 = arith.constant 0 : index
    %0 = memref.load %arg2[%c0] : memref<4xf32, #tpu.memory_space<smem>>
    %c1 = arith.constant 1 : index
    %1 = memref.load %arg2[%c1] : memref<4xf32, #tpu.memory_space<smem>>
    %c2 = arith.constant 2 : index
    %2 = memref.load %arg2[%c2] : memref<4xf32, #tpu.memory_space<smem>>
    %c3 = arith.constant 3 : index
    %3 = memref.load %arg2[%c3] : memref<4xf32, #tpu.memory_space<smem>>
    %c0_i32 = arith.constant 0 : i32
    %4 = arith.cmpi eq, %arg0, %c0_i32 : i32
    %5 = arith.extui %4 : i1 to i32
    %c0_i32_0 = arith.constant 0 : i32
    %6 = arith.cmpi ne, %5, %c0_i32_0 : i32
    scf.if %6 {
      %c0_34 = arith.constant 0 : index
      %c0_35 = arith.constant 0 : index
      %72 = vector.load %arg3[%c0_34, %c0_35] : memref<4x256xf32, #tpu.memory_space<vmem>>, vector<4x256xf32>
      %73 = vector.broadcast %2 : f32 to vector<4x256xf32>
      %74 = arith.mulf %72, %73 : vector<4x256xf32>
      %c0_36 = arith.constant 0 : index
      %c0_37 = arith.constant 0 : index
      %75 = vector.load %arg4[%c0_36, %c0_37] : memref<4x256xf32, #tpu.memory_space<vmem>>, vector<4x256xf32>
      %76 = vector.broadcast %1 : f32 to vector<4x256xf32>
      %77 = arith.mulf %75, %76 : vector<4x256xf32>
      %78 = arith.addf %74, %77 : vector<4x256xf32>
      %c0_38 = arith.constant 0 : index
      %c0_39 = arith.constant 0 : index
      %79 = vector.load %arg12[%c0_38, %c0_39] : memref<4x256xf32, #tpu.memory_space<vmem>>, vector<4x256xf32>
      tpu.vector_store %arg12[%c0_38, %c0_39], %78 {strides = array<i32>} : memref<4x256xf32, #tpu.memory_space<vmem>>, vector<4x256xf32>,
    } else {
    }
    %7 = arith.index_cast %arg0 : i32 to index
    %c0_1 = arith.constant 0 : index
    %8 = memref.load %arg1[%7, %c0_1] : memref<4x6xf32, #tpu.memory_space<smem>>
    %9 = arith.index_cast %arg0 : i32 to index
    %c1_2 = arith.constant 1 : index
    %10 = memref.load %arg1[%9, %c1_2] : memref<4x6xf32, #tpu.memory_space<smem>>
    %11 = arith.index_cast %arg0 : i32 to index
    %c2_3 = arith.constant 2 : index
    %12 = memref.load %arg1[%11, %c2_3] : memref<4x6xf32, #tpu.memory_space<smem>>
    %13 = arith.index_cast %arg0 : i32 to index
    %c3_4 = arith.constant 3 : index
    %14 = memref.load %arg1[%13, %c3_4] : memref<4x6xf32, #tpu.memory_space<smem>>
    %15 = arith.index_cast %arg0 : i32 to index
    %c4 = arith.constant 4 : index
    %16 = memref.load %arg1[%15, %c4] : memref<4x6xf32, #tpu.memory_space<smem>>
    %17 = arith.index_cast %arg0 : i32 to index
    %c5 = arith.constant 5 : index
    %18 = memref.load %arg1[%17, %c5] : memref<4x6xf32, #tpu.memory_space<smem>>
    %c0_5 = arith.constant 0 : index
    %c0_6 = arith.constant 0 : index
    %19 = vector.load %arg12[%c0_5, %c0_6] : memref<4x256xf32, #tpu.memory_space<vmem>>, vector<4x256xf32>
    %c0_7 = arith.constant 0 : index
    %c0_8 = arith.constant 0 : index
    %20 = vector.load %arg7[%c0_7, %c0_8] : memref<32x4xf32, #tpu.memory_space<vmem>>, vector<32x4xf32>
    %21 = vector.broadcast %14 : f32 to vector<4x256xf32>
    %22 = arith.mulf %19, %21 : vector<4x256xf32>
    %cst = arith.constant dense<0.000000e+00> : vector<32x256xf32>
    %23 = tpu.matmul %20, %22, %cst {dimension_numbers = #tpu.dot_dimension_numbers<[1], [0], [0], [1], [0, 0, 1, 1], [], []>} : vector<32x4xf32>, vector<4x256xf32>, vector<32x256xf32> -> vector<32x256xf32>
    %c0_9 = arith.constant 0 : index
    %c0_10 = arith.constant 0 : index
    %24 = vector.load %arg8[%c0_9, %c0_10] : memref<32x1xf32, #tpu.memory_space<vmem>>, vector<32x1xf32>
    %25 = vector.broadcast %24 : vector<32x1xf32> to vector<32x256xf32>
    %26 = arith.addf %23, %25 : vector<32x256xf32>
    %27 = vector.broadcast %18 : f32 to vector<32x256xf32>
    %28 = arith.addf %26, %27 : vector<32x256xf32>
    %c0_11 = arith.constant 0 : index
    %c0_12 = arith.constant 0 : index
    %29 = vector.load %arg6[%c0_11, %c0_12] : memref<32x2xf32, #tpu.memory_space<vmem>>, vector<32x1xf32>
    %30 = vector.broadcast %29 : vector<32x1xf32> to vector<32x256xf32>
    %31 = arith.addf %28, %30 : vector<32x256xf32>
    %cst_13 = arith.constant 0.000000e+00 : f32
    %32 = vector.broadcast %cst_13 : f32 to vector<32x256xf32>
    %33 = arith.maximumf %31, %32 : vector<32x256xf32>
    %c0_14 = arith.constant 0 : index
    %c1_15 = arith.constant 1 : index
    %34 = vector.load %arg6[%c0_14, %c1_15] : memref<32x2xf32, #tpu.memory_space<vmem>>, vector<32x1xf32>
    %35 = vector.broadcast %34 : vector<32x1xf32> to vector<32x256xf32>
    %36 = arith.addf %28, %35 : vector<32x256xf32>
    %cst_16 = arith.constant 0.000000e+00 : f32
    %37 = vector.broadcast %cst_16 : f32 to vector<32x256xf32>
    %38 = arith.maximumf %36, %37 : vector<32x256xf32>
    %c0_17 = arith.constant 0 : index
    %c0_18 = arith.constant 0 : index
    %39 = vector.load %arg9[%c0_17, %c0_18] : memref<4x32xf32, #tpu.memory_space<vmem>>, vector<4x32xf32>
    %cst_19 = arith.constant dense<0.000000e+00> : vector<4x256xf32>
    %40 = tpu.matmul %39, %33, %cst_19 {dimension_numbers = #tpu.dot_dimension_numbers<[1], [0], [0], [1], [0, 0, 1, 1], [], []>} : vector<4x32xf32>, vector<32x256xf32>, vector<4x256xf32> -> vector<4x256xf32>
    %c0_20 = arith.constant 0 : index
    %c0_21 = arith.constant 0 : index
    %41 = vector.load %arg10[%c0_20, %c0_21] : memref<4x1xf32, #tpu.memory_space<vmem>>, vector<4x1xf32>
    %42 = vector.broadcast %41 : vector<4x1xf32> to vector<4x256xf32>
    %43 = arith.addf %40, %42 : vector<4x256xf32>
    %c0_22 = arith.constant 0 : index
    %c0_23 = arith.constant 0 : index
    %44 = vector.load %arg9[%c0_22, %c0_23] : memref<4x32xf32, #tpu.memory_space<vmem>>, vector<4x32xf32>
    %cst_24 = arith.constant dense<0.000000e+00> : vector<4x256xf32>
    %45 = tpu.matmul %44, %38, %cst_24 {dimension_numbers = #tpu.dot_dimension_numbers<[1], [0], [0], [1], [0, 0, 1, 1], [], []>} : vector<4x32xf32>, vector<32x256xf32>, vector<4x256xf32> -> vector<4x256xf32>
    %c0_25 = arith.constant 0 : index
    %c0_26 = arith.constant 0 : index
    %46 = vector.load %arg10[%c0_25, %c0_26] : memref<4x1xf32, #tpu.memory_space<vmem>>, vector<4x1xf32>
    %47 = vector.broadcast %46 : vector<4x1xf32> to vector<4x256xf32>
    %48 = arith.addf %45, %47 : vector<4x256xf32>
    %49 = arith.subf %43, %48 : vector<4x256xf32>
    %50 = vector.broadcast %0 : f32 to vector<4x256xf32>
    %51 = arith.mulf %49, %50 : vector<4x256xf32>
    %52 = arith.addf %48, %51 : vector<4x256xf32>
    %53 = vector.broadcast %16 : f32 to vector<4x256xf32>
    %54 = arith.mulf %52, %53 : vector<4x256xf32>
    %55 = arith.addf %19, %54 : vector<4x256xf32>
    %56 = arith.subf %19, %55 : vector<4x256xf32>
    %57 = vector.broadcast %8 : f32 to vector<4x256xf32>
    %58 = arith.divf %56, %57 : vector<4x256xf32>
    %59 = arith.subf %10, %8 : f32
    %60 = vector.broadcast %59 : f32 to vector<4x256xf32>
    %61 = arith.mulf %58, %60 : vector<4x256xf32>
    %62 = arith.addf %19, %61 : vector<4x256xf32>
    %c0_27 = arith.constant 0 : index
    %c0_28 = arith.constant 0 : index
    %c0_29 = arith.constant 0 : index
    %63 = vector.load %arg5[%c0_27, %c0_28, %c0_29] : memref<1x4x256xf32, #tpu.memory_space<vmem>>, vector<1x4x256xf32>
    %64 = vector.shape_cast %63 : vector<1x4x256xf32> to vector<4x256xf32>
    %65 = vector.broadcast %12 : f32 to vector<4x256xf32>
    %66 = arith.mulf %64, %65 : vector<4x256xf32>
    %67 = arith.addf %62, %66 : vector<4x256xf32>
    %c0_30 = arith.constant 0 : index
    %c0_31 = arith.constant 0 : index
    %68 = vector.load %arg12[%c0_30, %c0_31] : memref<4x256xf32, #tpu.memory_space<vmem>>, vector<4x256xf32>
    tpu.vector_store %arg12[%c0_30, %c0_31], %67 {strides = array<i32>} : memref<4x256xf32, #tpu.memory_space<vmem>>, vector<4x256xf32>,
    %69 = vector.broadcast %3 : f32 to vector<4x256xf32>
    %70 = arith.mulf %67, %69 : vector<4x256xf32>
    %c0_32 = arith.constant 0 : index
    %c0_33 = arith.constant 0 : index
    %71 = vector.load %arg11[%c0_32, %c0_33] : memref<4x256xf32, #tpu.memory_space<vmem>>, vector<4x256xf32>
    tpu.vector_store %arg11[%c0_32, %c0_33], %70 {strides = array<i32>} : memref<4x256xf32, #tpu.memory_space<vmem>>, vector<4x256xf32>,
    return
  }
  func.func @transform_0(%arg0: i32) -> (i32, i32) {
    %c0_i32 = arith.constant 0 : i32
    %c0_i32_0 = arith.constant 0 : i32
    %c0_i32_1 = arith.constant 0 : i32
    return %c0_i32, %c0_i32_0 : i32, i32
  }
  func.func @transform_1(%arg0: i32) -> i32 {
    %c0_i32 = arith.constant 0 : i32
    %c0_i32_0 = arith.constant 0 : i32
    return %c0_i32 : i32
  }
  func.func @transform_2(%arg0: i32) -> (i32, i32) {
    %c0_i32 = arith.constant 0 : i32
    %c0_i32_0 = arith.constant 0 : i32
    %c0_i32_1 = arith.constant 0 : i32
    return %c0_i32, %c0_i32_0 : i32, i32
  }
  func.func @transform_3(%arg0: i32) -> (i32, i32) {
    %c0_i32 = arith.constant 0 : i32
    %c0_i32_0 = arith.constant 0 : i32
    %c0_i32_1 = arith.constant 0 : i32
    return %c0_i32, %c0_i32_0 : i32, i32
  }
  func.func @transform_4(%arg0: i32) -> (i32, i32, i32) {
    %c0_i32 = arith.constant 0 : i32
    %c0_i32_0 = arith.constant 0 : i32
    %c0_i32_1 = arith.constant 0 : i32
    return %arg0, %c0_i32, %c0_i32_0 : i32, i32, i32
  }
  func.func @transform_5(%arg0: i32) -> (i32, i32) {
    %c0_i32 = arith.constant 0 : i32
    %c0_i32_0 = arith.constant 0 : i32
    %c0_i32_1 = arith.constant 0 : i32
    return %c0_i32, %c0_i32_0 : i32, i32
  }
  func.func @transform_6(%arg0: i32) -> (i32, i32) {
    %c0_i32 = arith.constant 0 : i32
    %c0_i32_0 = arith.constant 0 : i32
    %c0_i32_1 = arith.constant 0 : i32
    return %c0_i32, %c0_i32_0 : i32, i32
  }
  func.func @transform_7(%arg0: i32) -> (i32, i32) {
    %c0_i32 = arith.constant 0 : i32
    %c0_i32_0 = arith.constant 0 : i32
    %c0_i32_1 = arith.constant 0 : i32
    return %c0_i32, %c0_i32_0 : i32, i32
  }
  func.func @transform_8(%arg0: i32) -> (i32, i32) {
    %c0_i32 = arith.constant 0 : i32
    %c0_i32_0 = arith.constant 0 : i32
    %c0_i32_1 = arith.constant 0 : i32
    return %c0_i32, %c0_i32_0 : i32, i32
  }
  func.func @transform_9(%arg0: i32) -> (i32, i32) {
    %c0_i32 = arith.constant 0 : i32
    %c0_i32_0 = arith.constant 0 : i32
    %c0_i32_1 = arith.constant 0 : i32
    return %c0_i32, %c0_i32_0 : i32, i32
  }
  func.func @transform_10(%arg0: i32) -> (i32, i32) {
    %c0_i32 = arith.constant 0 : i32
    %c0_i32_0 = arith.constant 0 : i32
    %c0_i32_1 = arith.constant 0 : i32
    return %c0_i32, %c0_i32_0 : i32, i32
  }
}

</mosaic_0001>

<llo_original>
// kernel: tpu_custom_call.1
$region0: #{tpu_custom_call.1}
  #allocation0 [shape = 'u32[]', space=smem, size = 0x4, offset = 0x4, fixed_abs, tag = 'smem constant byte address 0x4 - core index']
  #allocation1 [shape = 'u32[144,128]{1,0:T(1,128)}', space=vmem, size = 0x12000, scoped, tag = 'internal scratch']
  #allocation2 [shape = 'f32[4,256]{1,0:T(4,128)}', space=vmem, size = 0x1000, scoped, tag = 'scratch operand']
  %s0 = inlined_call_operand.vmem [shape: f32[4,6], index: 0, kind: input, shape index: {}]
  %s1 = inlined_call_operand.vmem [shape: f32[4], index: 1, kind: input, shape index: {}]
  %s2 = inlined_call_operand.vmem [shape: f32[4,256], index: 2, kind: input, shape index: {}]
  %s3 = inlined_call_operand.vmem [shape: f32[4,256], index: 3, kind: input, shape index: {}]
  %s4 = inlined_call_operand.vmem [shape: f32[4,4,256], index: 4, kind: input, shape index: {}]
  %s5 = inlined_call_operand.vmem [shape: f32[32,2], index: 5, kind: input, shape index: {}]
  %s6 = inlined_call_operand.vmem [shape: f32[32,4], index: 6, kind: input, shape index: {}]
  %s7 = inlined_call_operand.vmem [shape: f32[32,1], index: 7, kind: input, shape index: {}]
  %s8 = inlined_call_operand.vmem [shape: f32[4,32], index: 8, kind: input, shape index: {}]
  %s9 = inlined_call_operand.vmem [shape: f32[4,1], index: 9, kind: input, shape index: {}]
  %s10 = inlined_call_operand.hbm [shape: f32[4,256], index: 10, kind: output, shape index: {}]
  %s11 = sld [smem:[#allocation0]]
  $region85: #{tpu_custom_call.1} parent=0
    _
  %s13 = ssub.s32 1, %s11
  %s14 = scalar_select 0, %s13, %s11
  $region1: #{tpu_custom_call.1} parent=0
    #allocation3 [shape = 'u8[2048]{0}', space=smem, size = 0x800, scoped, tag = 'input window, operand 0, single buffered']
    #allocation4 [shape = 's32[2]{0}', space=sflag, size = 0x8, scoped, tag = 'scoped memory for tpu_custom_call.1']
    #allocation5 [shape = 's32[2]{0}', space=sflag, size = 0x8, scoped, tag = 'scoped memory for tpu_custom_call.1']
    #allocation6 [shape = 'u8[512]{0}', space=smem, size = 0x200, scoped, tag = 'input window, operand 1, single buffered']
    #allocation7 [shape = 's32[1]{0}', space=sflag, size = 0x4, scoped, tag = 'scoped memory for tpu_custom_call.1']
    #allocation8 [shape = 'u8[4096]{0}', space=vmem, size = 0x1000, scoped, tag = 'output window, operand 0, single buffered']
    %15 = vsyncpa [#allocation5], 0
    %16 = vsyncpa [#allocation7], 0
    %17 = vsyncpa [#allocation4], 0
    loop: start=0, step=1, limit=6
    $region2: #{tpu_custom_call.1} parent=1 // loop_pre_header
      _
    $region3: #{tpu_custom_call.1} parent=1 // loop_header
      %s19 = sphi 0, %s23
      %p20 = scmp.ge.s32.totalorder %s19, 6
      %s27 = sphi 0, %s27
      %s29 = sphi 0, %s27
      %s30 = sphi 0, %s29
      %s44 = sphi 0, %s30
      %s48 = sphi 0, %s48
      %s50 = sphi 0, %s48
      %s51 = sphi 0, %s50
      %s65 = sphi 0, %s51
      %s69 = sphi 0, %s69
      %s71 = sphi 0, %s69
      %s72 = sphi 0, %s71
      %s86 = sphi 0, %s72
      %s90 = sphi 0, %s90
      %s92 = sphi 0, %s90
      %s93 = sphi 0, %s92
      %s107 = sphi 0, %s93
      %s113 = sphi 0, %s115
      %s116 = sphi 0, %s113
      %s117 = sphi 0, %s116
      %s133 = sphi 0, %s117
      %s137 = sphi 0, %s137
      %s139 = sphi 0, %s137
      %s140 = sphi 0, %s139
      %s154 = sphi 0, %s140
      %s158 = sphi 0, %s158
      %s160 = sphi 0, %s158
      %s161 = sphi 0, %s160
      %s175 = sphi 0, %s161
      %s179 = sphi 0, %s179
      %s181 = sphi 0, %s179
      %s182 = sphi 0, %s181
      %s196 = sphi 0, %s182
      %s200 = sphi 0, %s200
      %s202 = sphi 0, %s200
      %s203 = sphi 0, %s202
      %s217 = sphi 0, %s203
      %s221 = sphi 0, %s221
      %s223 = sphi 0, %s221
      %s224 = sphi 0, %s223
      %s238 = sphi 0, %s224
      %s242 = sphi 0, %s242
      %s244 = sphi 0, %s242
      %s245 = sphi 0, %s244
      %s259 = sphi 0, %s245
    $region4: #{tpu_custom_call.1} parent=1 // loop_header_branch
      %22 = sbr.rel (%p20) target = $region8
    $region5: #{tpu_custom_call.1} parent=1 // loop_body
      %s24 = ssub.s32 %s19, 1
      %s25 = ssub.s32 %s19, 2
      %s26 = sadd.s32 %s19, 1
      %s28 = sadd.s32 %s27, 1
      %p31 = scmp.eq.s32.totalorder %s19, 3
      %p32 = scmp.ne.s32.totalorder %s27, %s29
      %p33 = scmp.eq.s32.totalorder %s19, 0
      %p34 = por %p32, %p33
      %p35 = scmp.ne.s32.totalorder %s27, %s29
      %p36 = scmp.eq.s32.totalorder %s24, 3
      %p37 = por %p35, %p36
      %p38 = scmp.ne.s32.totalorder %s29, %s30
      %p39 = scmp.eq.s32.totalorder %s24, 0
      %p40 = por %p38, %p39
      %p41 = scmp.ne.s32.totalorder %s29, %s30
      %p42 = scmp.eq.s32.totalorder %s25, 3
      %p43 = por %p41, %p42
      %p45 = scmp.ne.s32.totalorder %s30, %s44
      %p46 = scmp.eq.s32.totalorder %s25, 0
      %p47 = por %p45, %p46
      %s49 = sadd.s32 %s48, 1
      %p52 = scmp.eq.s32.totalorder %s19, 3
      %p53 = scmp.ne.s32.totalorder %s48, %s50
      %p54 = scmp.eq.s32.totalorder %s19, 0
      %p55 = por %p53, %p54
      %p56 = scmp.ne.s32.totalorder %s48, %s50
      %p57 = scmp.eq.s32.totalorder %s24, 3
      %p58 = por %p56, %p57
      %p59 = scmp.ne.s32.totalorder %s50, %s51
      %p60 = scmp.eq.s32.totalorder %s24, 0
      %p61 = por %p59, %p60
      %p62 = scmp.ne.s32.totalorder %s50, %s51
      %p63 = scmp.eq.s32.totalorder %s25, 3
      %p64 = por %p62, %p63
      %p66 = scmp.ne.s32.totalorder %s51, %s65
      %p67 = scmp.eq.s32.totalorder %s25, 0
      %p68 = por %p66, %p67
      %s70 = sadd.s32 %s69, 1
      %p73 = scmp.eq.s32.totalorder %s19, 3
      %p74 = scmp.ne.s32.totalorder %s69, %s71
      %p75 = scmp.eq.s32.totalorder %s19, 0
      %p76 = por %p74, %p75
      %p77 = scmp.ne.s32.totalorder %s69, %s71
      %p78 = scmp.eq.s32.totalorder %s24, 3
      %p79 = por %p77, %p78
      %p80 = scmp.ne.s32.totalorder %s71, %s72
      %p81 = scmp.eq.s32.totalorder %s24, 0
      %p82 = por %p80, %p81
      %p83 = scmp.ne.s32.totalorder %s71, %s72
      %p84 = scmp.eq.s32.totalorder %s25, 3
      %p85 = por %p83, %p84
      %p87 = scmp.ne.s32.totalorder %s72, %s86
      %p88 = scmp.eq.s32.totalorder %s25, 0
      %p89 = por %p87, %p88
      %s91 = sadd.s32 %s90, 1
      %p94 = scmp.eq.s32.totalorder %s19, 3
      %p95 = scmp.ne.s32.totalorder %s90, %s92
      %p96 = scmp.eq.s32.totalorder %s19, 0
      %p97 = por %p95, %p96
      %p98 = scmp.ne.s32.totalorder %s90, %s92
      %p99 = scmp.eq.s32.totalorder %s24, 3
      %p100 = por %p98, %p99
      %p101 = scmp.ne.s32.totalorder %s92, %s93
      %p102 = scmp.eq.s32.totalorder %s24, 0
      %p103 = por %p101, %p102
      %p104 = scmp.ne.s32.totalorder %s92, %s93
      %p105 = scmp.eq.s32.totalorder %s25, 3
      %p106 = por %p104, %p105
      %p108 = scmp.ne.s32.totalorder %s93, %s107
      %p109 = scmp.eq.s32.totalorder %s25, 0
      %p110 = por %p108, %p109
      %s111 = ssub.s32 %s19, %s26
      %p112 = scmp.eq.s32.totalorder %s111, 0
      %s114 = sadd.s32 %s113, 1
      %s115 = scalar_select %p112, %s113, %s114
      %p118 = pneg %p112
      %p119 = scmp.eq.s32.totalorder %s19, 3
      %p120 = por %p118, %p119
      %p121 = scmp.ne.s32.totalorder %s113, %s116
      %p122 = scmp.eq.s32.totalorder %s19, 0
      %p123 = por %p121, %p122
      %p124 = scmp.ne.s32.totalorder %s113, %s116
      %p125 = scmp.eq.s32.totalorder %s24, 3
      %p126 = por %p124, %p125
      %p127 = scmp.ne.s32.totalorder %s116, %s117
      %p128 = scmp.eq.s32.totalorder %s24, 0
      %p129 = por %p127, %p128
      %p130 = scmp.ne.s32.totalorder %s116, %s117
      %p131 = scmp.eq.s32.totalorder %s25, 3
      %p132 = por %p130, %p131
      %p134 = scmp.ne.s32.totalorder %s117, %s133
      %p135 = scmp.eq.s32.totalorder %s25, 0
      %p136 = por %p134, %p135
      %s138 = sadd.s32 %s137, 1
      %p141 = scmp.eq.s32.totalorder %s19, 3
      %p142 = scmp.ne.s32.totalorder %s137, %s139
      %p143 = scmp.eq.s32.totalorder %s19, 0
      %p144 = por %p142, %p143
      %p145 = scmp.ne.s32.totalorder %s137, %s139
      %p146 = scmp.eq.s32.totalorder %s24, 3
      %p147 = por %p145, %p146
      %p148 = scmp.ne.s32.totalorder %s139, %s140
      %p149 = scmp.eq.s32.totalorder %s24, 0
      %p150 = por %p148, %p149
      %p151 = scmp.ne.s32.totalorder %s139, %s140
      %p152 = scmp.eq.s32.totalorder %s25, 3
      %p153 = por %p151, %p152
      %p155 = scmp.ne.s32.totalorder %s140, %s154
      %p156 = scmp.eq.s32.totalorder %s25, 0
      %p157 = por %p155, %p156
      %s159 = sadd.s32 %s158, 1
      %p162 = scmp.eq.s32.totalorder %s19, 3
      %p163 = scmp.ne.s32.totalorder %s158, %s160
      %p164 = scmp.eq.s32.totalorder %s19, 0
      %p165 = por %p163, %p164
      %p166 = scmp.ne.s32.totalorder %s158, %s160
      %p167 = scmp.eq.s32.totalorder %s24, 3
      %p168 = por %p166, %p167
      %p169 = scmp.ne.s32.totalorder %s160, %s161
      %p170 = scmp.eq.s32.totalorder %s24, 0
      %p171 = por %p169, %p170
      %p172 = scmp.ne.s32.totalorder %s160, %s161
      %p173 = scmp.eq.s32.totalorder %s25, 3
      %p174 = por %p172, %p173
      %p176 = scmp.ne.s32.totalorder %s161, %s175
      %p177 = scmp.eq.s32.totalorder %s25, 0
      %p178 = por %p176, %p177
      %s180 = sadd.s32 %s179, 1
      %p183 = scmp.eq.s32.totalorder %s19, 3
      %p184 = scmp.ne.s32.totalorder %s179, %s181
      %p185 = scmp.eq.s32.totalorder %s19, 0
      %p186 = por %p184, %p185
      %p187 = scmp.ne.s32.totalorder %s179, %s181
      %p188 = scmp.eq.s32.totalorder %s24, 3
      %p189 = por %p187, %p188
      %p190 = scmp.ne.s32.totalorder %s181, %s182
      %p191 = scmp.eq.s32.totalorder %s24, 0
      %p192 = por %p190, %p191
      %p193 = scmp.ne.s32.totalorder %s181, %s182
      %p194 = scmp.eq.s32.totalorder %s25, 3
      %p195 = por %p193, %p194
      %p197 = scmp.ne.s32.totalorder %s182, %s196
      %p198 = scmp.eq.s32.totalorder %s25, 0
      %p199 = por %p197, %p198
      %s201 = sadd.s32 %s200, 1
      %p204 = scmp.eq.s32.totalorder %s19, 3
      %p205 = scmp.ne.s32.totalorder %s200, %s202
      %p206 = scmp.eq.s32.totalorder %s19, 0
      %p207 = por %p205, %p206
      %p208 = scmp.ne.s32.totalorder %s200, %s202
      %p209 = scmp.eq.s32.totalorder %s24, 3
      %p210 = por %p208, %p209
      %p211 = scmp.ne.s32.totalorder %s202, %s203
      %p212 = scmp.eq.s32.totalorder %s24, 0
      %p213 = por %p211, %p212
      %p214 = scmp.ne.s32.totalorder %s202, %s203
      %p215 = scmp.eq.s32.totalorder %s25, 3
      %p216 = por %p214, %p215
      %p218 = scmp.ne.s32.totalorder %s203, %s217
      %p219 = scmp.eq.s32.totalorder %s25, 0
      %p220 = por %p218, %p219
      %s222 = sadd.s32 %s221, 1
      %p225 = scmp.eq.s32.totalorder %s19, 3
      %p226 = scmp.ne.s32.totalorder %s221, %s223
      %p227 = scmp.eq.s32.totalorder %s19, 0
      %p228 = por %p226, %p227
      %p229 = scmp.ne.s32.totalorder %s221, %s223
      %p230 = scmp.eq.s32.totalorder %s24, 3
      %p231 = por %p229, %p230
      %p232 = scmp.ne.s32.totalorder %s223, %s224
      %p233 = scmp.eq.s32.totalorder %s24, 0
      %p234 = por %p232, %p233
      %p235 = scmp.ne.s32.totalorder %s223, %s224
      %p236 = scmp.eq.s32.totalorder %s25, 3
      %p237 = por %p235, %p236
      %p239 = scmp.ne.s32.totalorder %s224, %s238
      %p240 = scmp.eq.s32.totalorder %s25, 0
      %p241 = por %p239, %p240
      %s243 = sadd.s32 %s242, 1
      %p246 = scmp.eq.s32.totalorder %s19, 3
      %p247 = scmp.ne.s32.totalorder %s242, %s244
      %p248 = scmp.eq.s32.totalorder %s19, 0
      %p249 = por %p247, %p248
      %p250 = scmp.ne.s32.totalorder %s242, %s244
      %p251 = scmp.eq.s32.totalorder %s24, 3
      %p252 = por %p250, %p251
      %p253 = scmp.ne.s32.totalorder %s244, %s245
      %p254 = scmp.eq.s32.totalorder %s24, 0
      %p255 = por %p253, %p254
      %p256 = scmp.ne.s32.totalorder %s244, %s245
      %p257 = scmp.eq.s32.totalorder %s25, 3
      %p258 = por %p256, %p257
      %p260 = scmp.ne.s32.totalorder %s245, %s259
      %p261 = scmp.eq.s32.totalorder %s25, 0
      %p262 = por %p260, %p261
      %p263 = scmp.le.s32.totalorder 1, %s19
      %p264 = scmp.lt.s32.totalorder %s19, 5
      %p265 = pnand %p263, %p264
      %p266 = pneg %p265
      // Predicated region
      $region9: #{tpu_custom_call.1} parent=5 // pred_check
        _
      $region10: #{tpu_custom_call.1} parent=5 // pred_check_branch
        %268 = sbr.rel (%p265) target = $region12
      $region11: #{tpu_custom_call.1} parent=5 // pred_region
        %s269 = ssub.s32 %s19, 1
        // Predicated region
        $region13: #{tpu_custom_call.1} parent=11 // pred_check
          %p270 = pneg %p40
        $region14: #{tpu_custom_call.1} parent=11 // pred_check_branch
          %272 = sbr.rel (%p270) target = $region16
        $region15: #{tpu_custom_call.1} parent=11 // pred_region
          %s274 = ssub.s32 64, 64
          %275 = vsyncadd [#allocation5], %s274
          %s277 = sshll.u32 %s0, 4
          %s278 = int_to_ptr.vmem [resolvable:$true] %s277
          %280 = dma.vmem_to_smem %s278, 64, [#allocation3], [#allocation5]
        $region16: #{tpu_custom_call.1} parent=11 // pred_fallthru
          _
        // Predicated region
        $region17: #{tpu_custom_call.1} parent=11 // pred_check
          %p281 = pneg %p61
        $region18: #{tpu_custom_call.1} parent=11 // pred_check_branch
          %283 = sbr.rel (%p281) target = $region20
        $region19: #{tpu_custom_call.1} parent=11 // pred_region
          %s285 = ssub.s32 16, 16
          %286 = vsyncadd [#allocation7], %s285
          %s288 = sshll.u32 %s1, 4
          %s289 = int_to_ptr.vmem [resolvable:$true] %s288
          %291 = dma.vmem_to_smem %s289, 16, [#allocation6], [#allocation7]
        $region20: #{tpu_custom_call.1} parent=11 // pred_fallthru
          _
        // Predicated region
        $region21: #{tpu_custom_call.1} parent=11 // pred_check
          %p292 = pneg %p82
        $region22: #{tpu_custom_call.1} parent=11 // pred_check_branch
          %294 = sbr.rel (%p292) target = $region24
        $region23: #{tpu_custom_call.1} parent=11 // pred_region
          _
        $region24: #{tpu_custom_call.1} parent=11 // pred_fallthru
          _
        // Predicated region
        $region25: #{tpu_custom_call.1} parent=11 // pred_check
          %p295 = pneg %p103
        $region26: #{tpu_custom_call.1} parent=11 // pred_check_branch
          %297 = sbr.rel (%p295) target = $region28
        $region27: #{tpu_custom_call.1} parent=11 // pred_region
          _
        $region28: #{tpu_custom_call.1} parent=11 // pred_fallthru
          _
        // Predicated region
        $region29: #{tpu_custom_call.1} parent=11 // pred_check
          %p298 = pneg %p150
        $region30: #{tpu_custom_call.1} parent=11 // pred_check_branch
          %300 = sbr.rel (%p298) target = $region32
        $region31: #{tpu_custom_call.1} parent=11 // pred_region
          _
        $region32: #{tpu_custom_call.1} parent=11 // pred_fallthru
          _
        // Predicated region
        $region33: #{tpu_custom_call.1} parent=11 // pred_check
          %p301 = pneg %p171
        $region34: #{tpu_custom_call.1} parent=11 // pred_check_branch
          %303 = sbr.rel (%p301) target = $region36
        $region35: #{tpu_custom_call.1} parent=11 // pred_region
          _
        $region36: #{tpu_custom_call.1} parent=11 // pred_fallthru
          _
        // Predicated region
        $region37: #{tpu_custom_call.1} parent=11 // pred_check
          %p304 = pneg %p192
        $region38: #{tpu_custom_call.1} parent=11 // pred_check_branch
          %306 = sbr.rel (%p304) target = $region40
        $region39: #{tpu_custom_call.1} parent=11 // pred_region
          _
        $region40: #{tpu_custom_call.1} parent=11 // pred_fallthru
          _
        // Predicated region
        $region41: #{tpu_custom_call.1} parent=11 // pred_check
          %p307 = pneg %p213
        $region42: #{tpu_custom_call.1} parent=11 // pred_check_branch
          %309 = sbr.rel (%p307) target = $region44
        $region43: #{tpu_custom_call.1} parent=11 // pred_region
          _
        $region44: #{tpu_custom_call.1} parent=11 // pred_fallthru
          _
        // Predicated region
        $region45: #{tpu_custom_call.1} parent=11 // pred_check
          %p310 = pneg %p234
        $region46: #{tpu_custom_call.1} parent=11 // pred_check_branch
          %312 = sbr.rel (%p310) target = $region48
        $region47: #{tpu_custom_call.1} parent=11 // pred_region
          _
        $region48: #{tpu_custom_call.1} parent=11 // pred_fallthru
          _
      $region12: #{tpu_custom_call.1} parent=5 // pred_fallthru
        _
      %p313 = scmp.lt.s32.totalorder %s19, 4
      // Predicated region
      $region49: #{tpu_custom_call.1} parent=5 // pred_check
        %p314 = pneg %p313
      $region50: #{tpu_custom_call.1} parent=5 // pred_check_branch
        %316 = sbr.rel (%p314) target = $region52
      $region51: #{tpu_custom_call.1} parent=5 // pred_region
        // Predicated region
        $region53: #{tpu_custom_call.1} parent=51 // pred_check
          %p317 = pneg %p123
        $region54: #{tpu_custom_call.1} parent=51 // pred_check_branch
          %319 = sbr.rel (%p317) target = $region56
        $region55: #{tpu_custom_call.1} parent=51 // pred_region
          %p320 = scmp.lt.s32.totalorder %s19, 3
          %s321 = scalar_select %p320, %s19, 3
          %s322 = smul.addr %s321, 2
          %s323 = smul.addr %s322, 4
          %s324 = scalar_lea.vmem %s4, %s323
        $region56: #{tpu_custom_call.1} parent=51 // pred_fallthru
          _
      $region52: #{tpu_custom_call.1} parent=5 // pred_fallthru
        _
      %p325 = scmp.le.s32.totalorder 1, %s19
      %p326 = scmp.lt.s32.totalorder %s19, 5
      %p327 = pnand %p325, %p326
      %p328 = pneg %p327
      // Predicated region
      $region57: #{tpu_custom_call.1} parent=5 // pred_check
        _
      $region58: #{tpu_custom_call.1} parent=5 // pred_check_branch
        %330 = sbr.rel (%p327) target = $region60
      $region59: #{tpu_custom_call.1} parent=5 // pred_region
        %s331 = ssub.s32 %s19, 1
        // Predicated region
        $region61: #{tpu_custom_call.1} parent=59 // pred_check
          %p332 = pneg %p40
        $region62: #{tpu_custom_call.1} parent=59 // pred_check_branch
          %334 = sbr.rel (%p332) target = $region64
        $region63: #{tpu_custom_call.1} parent=59 // pred_region
          %335 = dma.done [#allocation5], 64
        $region64: #{tpu_custom_call.1} parent=59 // pred_fallthru
          _
        // Predicated region
        $region65: #{tpu_custom_call.1} parent=59 // pred_check
          %p336 = pneg %p61
        $region66: #{tpu_custom_call.1} parent=59 // pred_check_branch
          %338 = sbr.rel (%p336) target = $region68
        $region67: #{tpu_custom_call.1} parent=59 // pred_region
          %339 = dma.done [#allocation7], 16
        $region68: #{tpu_custom_call.1} parent=59 // pred_fallthru
          _
        %340 = sfence
        %p341 = pneg %p40
        %p342 = pneg %p37
        %p343 = pneg %p61
        %p344 = pneg %p58
        %p345 = pneg %p82
        %p346 = pneg %p79
        %p347 = pneg %p103
        %p348 = pneg %p100
        %p349 = scmp.lt.s32.totalorder %s24, 3
        %s350 = scalar_select %p349, %s24, 3
        %s351 = smul.addr %s350, 2
        %s352 = smul.addr %s351, 4
        %s353 = scalar_lea.vmem %s4, %s352
        %p354 = pneg %p129
        %p355 = pneg %p126
        %p356 = pneg %p150
        %p357 = pneg %p147
        %p358 = pneg %p171
        %p359 = pneg %p168
        %p360 = pneg %p192
        %p361 = pneg %p189
        %p362 = pneg %p213
        %p363 = pneg %p210
        %p364 = pneg %p234
        %p365 = pneg %p231
        %p366 = pneg %p255
        %p367 = pneg %p252
        %p368 = scmp.lt.s32.totalorder %s24, 3
        %s369 = scalar_select %p368, %s24, 3
        %s370 = smul.addr %s369, 2
        %s371 = smul.addr %s370, 4
        %s372 = scalar_lea.vmem %s4, %s371
        %s373 = sld [smem:[#allocation6]]
        %s374 = sld [smem:[#allocation6 + $0x1]]
        %s375 = sld [smem:[#allocation6 + $0x2]]
        %s376 = sld [smem:[#allocation6 + $0x3]]
        %p377 = scmp.eq.s32.totalorder %s24, 0
        // Predicated region
        $region69: #{tpu_custom_call.1} parent=59 // pred_check
          %p378 = pneg %p377
        $region70: #{tpu_custom_call.1} parent=59 // pred_check_branch
          %380 = sbr.rel (%p378) target = $region72
        $region71: #{tpu_custom_call.1} parent=59 // pred_region
          %v381 = vld [vmem:[%s2] sm:$0xff]
          %v382 = vstv %s375
          %v383 = vmul.f32 %v381, %v382
          %v384 = vld [vmem:[%s3] sm:$0xff]
          %v385 = vstv %s374
          %v386 = vmul.f32 %v384, %v385
          %v387 = vadd.f32 %v383, %v386
          %388 = vst [vmem:[#allocation2] sm:$0xff] %v387
        $region72: #{tpu_custom_call.1} parent=59 // pred_fallthru
          _
        %s389 = smul.u32 %s24, 128
        %s390 = sld [smem:[#allocation3 + %s389]]
        %s391 = sadd.s32 %s389, 1
        %s392 = sld [smem:[#allocation3 + %s391]]
        %s393 = sadd.s32 %s389, 2
        %s394 = sld [smem:[#allocation3 + %s393]]
        %s395 = sadd.s32 %s389, 3
        %s396 = sld [smem:[#allocation3 + %s395]]
        %s397 = sadd.s32 %s389, 4
        %s398 = sld [smem:[#allocation3 + %s397]]
        %s399 = sadd.s32 %s389, 5
        %s400 = sld [smem:[#allocation3 + %s399]]
        %v401 = vld [vmem:[#allocation2] sm:$0xff]
        %v402 = vld [vmem:[%s6] sm:$0xff]
        %v403 = vld [vmem:[%s6 + $0x8] sm:$0xff]
        %v404 = vld [vmem:[%s6 + $0x10] sm:$0xff]
        %v405 = vld [vmem:[%s6 + $0x18] sm:$0xff]
        %v406 = vstv %s396
        %v407 = vmul.f32 %v401, %v406
        %v408 = vld [vmem:[%s7] sm:$0xff]
        %v409 = vld [vmem:[%s7 + $0x8] sm:$0xff]
        %v410 = vld [vmem:[%s7 + $0x10] sm:$0xff]
        %v411 = vld [vmem:[%s7 + $0x18] sm:$0xff]
        %413 = vset.pattern.permute.xlu0 0
        %414 = vperm.xlu0 %413, %v408
        %v415 = vpop.permute.xlu0 %414
        %418 = vset.pattern.permute.xlu0 0
        %419 = vperm.xlu0 %418, %v409
        %v420 = vpop.permute.xlu0 %419
        %423 = vset.pattern.permute.xlu0 0
        %424 = vperm.xlu0 %423, %v410
        %v425 = vpop.permute.xlu0 %424
        %428 = vset.pattern.permute.xlu0 0
        %429 = vperm.xlu0 %428, %v411
        %v430 = vpop.permute.xlu0 %429
        %v433 = vcombine.high %v407, %v407
        %vm434 = vcmask 31744
        %v436 = vsel %vm434, %v402, 0
        %v439 = vsel %vm434, %v403, 0
        %v442 = vsel %vm434, %v404, 0
        %v445 = vsel %vm434, %v405, 0
        %vm447 = vcmask 1043456
        %v448 = vsel %vm447, %v407, 0
        %v450 = vsel %vm447, %v433, 0
        %452 = vmatprep.subr.mxu0 0.0
        %453 = vmatpush1.msra.mxu0 0.0
        %454 = vmatprep.subr.mxu0 0.0
        %455 = vmatpush1.msra.mxu0 0.0
        %456 = vmatprep.subr.mxu0 0.0
        %457 = vmatpush1.msra.mxu0 0.0
        %458 = vmatprep.subr.mxu0 0.0
        %459 = vmatpush1.msra.mxu0 0.0
        %460 = vmatprep.subr.mxu0 0.0
        %461 = vmatpush1.msra.mxu0 0.0
        %462 = vmatprep.subr.mxu0 0.0
        %463 = vmatpush1.msra.mxu0 0.0
        %464 = vmatprep.subr.mxu0 0.0
        %465 = vmatpush1.msra.mxu0 0.0
        %466 = vmatprep.subr.mxu0 0.0
        %467 = vmatpush1.msra.mxu0 0.0
        %468 = vmatprep.subr.mxu0 0.0
        %469 = vmatpush1.msra.mxu0 0.0
        %470 = vmatprep.subr.mxu0 0.0
        %471 = vmatpush1.msra.mxu0 0.0
        %472 = vmatprep.subr.mxu0 0.0
        %473 = vmatpush1.msra.mxu0 0.0
        %474 = vmatprep.subr.mxu0 0.0
        %475 = vmatpush1.msra.mxu0 0.0
        %476 = vmatprep.subr.mxu0 0.0
        %477 = vmatpush1.msra.mxu0 0.0
        %478 = vmatprep.subr.mxu0 0.0
        %479 = vmatpush1.msra.mxu0 0.0
        %480 = vmatprep.subr.mxu0 0.0
        %481 = vmatpush1.msra.mxu0 0.0
        %482 = vmatprep.subr.mxu0 %v450
        %483 = vmatpush1.msra.mxu0 %v448
        %484 = vmatprep.subr.mxu0 0.0
        %485 = vmatpush2.msra.mxu0 0.0
        %486 = vmatprep.subr.mxu0 0.0
        %487 = vmatpush2.msra.mxu0 0.0
        %488 = vmatprep.subr.mxu0 0.0
        %489 = vmatpush2.msra.mxu0 0.0
        %490 = vmatprep.subr.mxu0 0.0
        %491 = vmatpush2.msra.mxu0 0.0
        %492 = vmatprep.subr.mxu0 0.0
        %493 = vmatpush2.msra.mxu0 0.0
        %494 = vmatprep.subr.mxu0 0.0
        %495 = vmatpush2.msra.mxu0 0.0
        %496 = vmatprep.subr.mxu0 0.0
        %497 = vmatpush2.msra.mxu0 0.0
        %498 = vmatprep.subr.mxu0 0.0
        %499 = vmatpush2.msra.mxu0 0.0
        %500 = vmatprep.subr.mxu0 0.0
        %501 = vmatpush2.msra.mxu0 0.0
        %502 = vmatprep.subr.mxu0 0.0
        %503 = vmatpush2.msra.mxu0 0.0
        %504 = vmatprep.subr.mxu0 0.0
        %505 = vmatpush2.msra.mxu0 0.0
        %506 = vmatprep.subr.mxu0 0.0
        %507 = vmatpush2.msra.mxu0 0.0
        %508 = vmatprep.subr.mxu0 0.0
        %509 = vmatpush2.msra.mxu0 0.0
        %510 = vmatprep.subr.mxu0 0.0
        %511 = vmatpush2.msra.mxu0 0.0
        %512 = vmatprep.subr.mxu0 0.0
        %513 = vmatpush2.msra.mxu0 0.0
        %514 = vmatprep.subr.mxu0 0.0
        %515 = vmatpush2.msra.mxu0 0.0
        %516 = vmatprep.mubr.f32.mxu0 0.0
        %517 = vmatmul.mubr.f32.gmra.mxu0 %v436
        %v518 = vpop.f32.mrf.mxu0
        %v519 = vadd.f32 %v415, %v518
        %v520 = vpop.f32.mrf.mxu0
        %v521 = vadd.f32 %v415, %v520
        %522 = vmatprep.mubr.f32.mxu0 0.0
        %523 = vmatmul.mubr.f32.gmra.mxu0 %v439
        %v524 = vpop.f32.mrf.mxu0
        %v525 = vadd.f32 %v420, %v524
        %v526 = vpop.f32.mrf.mxu0
        %v527 = vadd.f32 %v420, %v526
        %528 = vmatprep.mubr.f32.mxu0 0.0
        %529 = vmatmul.mubr.f32.gmra.mxu0 %v442
        %v530 = vpop.f32.mrf.mxu0
        %v531 = vadd.f32 %v425, %v530
        %v532 = vpop.f32.mrf.mxu0
        %v533 = vadd.f32 %v425, %v532
        %534 = vmatprep.mubr.f32.mxu0 0.0
        %535 = vmatmul.mubr.f32.gmra.mxu0 %v445
        %v536 = vpop.f32.mrf.mxu0
        %v537 = vadd.f32 %v430, %v536
        %v538 = vpop.f32.mrf.mxu0
        %v539 = vadd.f32 %v430, %v538
        %540 = vdwg.mxu0
        %v541 = vstv %s400
        %v542 = vadd.f32 %v519, %v541
        %v543 = vadd.f32 %v521, %v541
        %v544 = vadd.f32 %v525, %v541
        %v545 = vadd.f32 %v527, %v541
        %v546 = vadd.f32 %v531, %v541
        %v547 = vadd.f32 %v533, %v541
        %v548 = vadd.f32 %v537, %v541
        %v549 = vadd.f32 %v539, %v541
        %v550 = vld [vmem:[%s5] sm:$0xff]
        %v551 = vld [vmem:[%s5 + $0x8] sm:$0xff]
        %v552 = vld [vmem:[%s5 + $0x10] sm:$0xff]
        %v553 = vld [vmem:[%s5 + $0x18] sm:$0xff]
        %555 = vset.pattern.permute.xlu0 0
        %556 = vperm.xlu0 %555, %v550
        %v557 = vpop.permute.xlu0 %556
        %560 = vset.pattern.permute.xlu0 0
        %561 = vperm.xlu0 %560, %v551
        %v562 = vpop.permute.xlu0 %561
        %565 = vset.pattern.permute.xlu0 0
        %566 = vperm.xlu0 %565, %v552
        %v567 = vpop.permute.xlu0 %566
        %570 = vset.pattern.permute.xlu0 0
        %571 = vperm.xlu0 %570, %v553
        %v572 = vpop.permute.xlu0 %571
        %v574 = vadd.f32 %v542, %v557
        %v575 = vadd.f32 %v543, %v557
        %v576 = vadd.f32 %v544, %v562
        %v577 = vadd.f32 %v545, %v562
        %v578 = vadd.f32 %v546, %v567
        %v579 = vadd.f32 %v547, %v567
        %v580 = vadd.f32 %v548, %v572
        %v581 = vadd.f32 %v549, %v572
        %v582 = vmax.f32 %v574, 0.0
        %v583 = vmax.f32 %v575, 0.0
        %v584 = vmax.f32 %v576, 0.0
        %v585 = vmax.f32 %v577, 0.0
        %v586 = vmax.f32 %v578, 0.0
        %v587 = vmax.f32 %v579, 0.0
        %v588 = vmax.f32 %v580, 0.0
        %v589 = vmax.f32 %v581, 0.0
        %590 = vset.pattern.permute.xlu0 1
        %591 = vperm.xlu0 %590, %v550
        %v592 = vpop.permute.xlu0 %591
        %594 = vset.pattern.permute.xlu0 1
        %595 = vperm.xlu0 %594, %v551
        %v596 = vpop.permute.xlu0 %595
        %598 = vset.pattern.permute.xlu0 1
        %599 = vperm.xlu0 %598, %v552
        %v600 = vpop.permute.xlu0 %599
        %602 = vset.pattern.permute.xlu0 1
        %603 = vperm.xlu0 %602, %v553
        %v604 = vpop.permute.xlu0 %603
        %v606 = vadd.f32 %v542, %v592
        %v607 = vadd.f32 %v543, %v592
        %v608 = vadd.f32 %v544, %v596
        %v609 = vadd.f32 %v545, %v596
        %v610 = vadd.f32 %v546, %v600
        %v611 = vadd.f32 %v547, %v600
        %v612 = vadd.f32 %v548, %v604
        %v613 = vadd.f32 %v549, %v604
        %v614 = vmax.f32 %v606, 0.0
        %v615 = vmax.f32 %v607, 0.0
        %v616 = vmax.f32 %v608, 0.0
        %v617 = vmax.f32 %v609, 0.0
        %v618 = vmax.f32 %v610, 0.0
        %v619 = vmax.f32 %v611, 0.0
        %v620 = vmax.f32 %v612, 0.0
        %v621 = vmax.f32 %v613, 0.0
        %v622 = vld [vmem:[%s8] sm:$0xf]
        %v623 = vld [vmem:[%s9] sm:$0xf]
        %625 = vset.pattern.permute.xlu0 0
        %626 = vperm.xlu0 %625, %v623
        %v627 = vpop.permute.xlu0 %626
        %vm629 = vcmask 261120
        %v631 = vsel %vm629, %v622, 0
        %633 = vmatprep.subr.mxu0 0.0
        %634 = vmatpush1.msra.mxu0 0.0
        %635 = vmatprep.subr.mxu0 0.0
        %636 = vmatpush1.msra.mxu0 0.0
        %637 = vmatprep.subr.mxu0 0.0
        %638 = vmatpush1.msra.mxu0 0.0
        %639 = vmatprep.subr.mxu0 0.0
        %640 = vmatpush1.msra.mxu0 0.0
        %641 = vmatprep.subr.mxu0 0.0
        %642 = vmatpush1.msra.mxu0 0.0
        %643 = vmatprep.subr.mxu0 0.0
        %644 = vmatpush1.msra.mxu0 0.0
        %645 = vmatprep.subr.mxu0 0.0
        %646 = vmatpush1.msra.mxu0 0.0
        %647 = vmatprep.subr.mxu0 0.0
        %648 = vmatpush1.msra.mxu0 0.0
        %649 = vmatprep.subr.mxu0 0.0
        %650 = vmatpush1.msra.mxu0 0.0
        %651 = vmatprep.subr.mxu0 0.0
        %652 = vmatpush1.msra.mxu0 0.0
        %653 = vmatprep.subr.mxu0 0.0
        %654 = vmatpush1.msra.mxu0 0.0
        %655 = vmatprep.subr.mxu0 0.0
        %656 = vmatpush1.msra.mxu0 0.0
        %657 = vmatprep.subr.mxu0 %v589
        %658 = vmatpush1.msra.mxu0 %v588
        %659 = vmatprep.subr.mxu0 %v587
        %660 = vmatpush1.msra.mxu0 %v586
        %661 = vmatprep.subr.mxu0 %v585
        %662 = vmatpush1.msra.mxu0 %v584
        %663 = vmatprep.subr.mxu0 %v583
        %664 = vmatpush1.msra.mxu0 %v582
        %665 = vmatprep.subr.mxu0 0.0
        %666 = vmatpush2.msra.mxu0 0.0
        %667 = vmatprep.subr.mxu0 0.0
        %668 = vmatpush2.msra.mxu0 0.0
        %669 = vmatprep.subr.mxu0 0.0
        %670 = vmatpush2.msra.mxu0 0.0
        %671 = vmatprep.subr.mxu0 0.0
        %672 = vmatpush2.msra.mxu0 0.0
        %673 = vmatprep.subr.mxu0 0.0
        %674 = vmatpush2.msra.mxu0 0.0
        %675 = vmatprep.subr.mxu0 0.0
        %676 = vmatpush2.msra.mxu0 0.0
        %677 = vmatprep.subr.mxu0 0.0
        %678 = vmatpush2.msra.mxu0 0.0
        %679 = vmatprep.subr.mxu0 0.0
        %680 = vmatpush2.msra.mxu0 0.0
        %681 = vmatprep.subr.mxu0 0.0
        %682 = vmatpush2.msra.mxu0 0.0
        %683 = vmatprep.subr.mxu0 0.0
        %684 = vmatpush2.msra.mxu0 0.0
        %685 = vmatprep.subr.mxu0 0.0
        %686 = vmatpush2.msra.mxu0 0.0
        %687 = vmatprep.subr.mxu0 0.0
        %688 = vmatpush2.msra.mxu0 0.0
        %689 = vmatprep.subr.mxu0 0.0
        %690 = vmatpush2.msra.mxu0 0.0
        %691 = vmatprep.subr.mxu0 0.0
        %692 = vmatpush2.msra.mxu0 0.0
        %693 = vmatprep.subr.mxu0 0.0
        %694 = vmatpush2.msra.mxu0 0.0
        %695 = vmatprep.subr.mxu0 0.0
        %696 = vmatpush2.msra.mxu0 0.0
        %697 = vmatprep.mubr.f32.mxu0 0.0
        %698 = vmatmul.mubr.f32.gmra.mxu0 %v631
        %v699 = vpop.f32.mrf.mxu0
        %v700 = vadd.f32 %v627, %v699
        %v701 = vpop.f32.mrf.mxu0
        %v702 = vadd.f32 %v627, %v701
        %703 = vdwg.mxu0
        %704 = vmatprep.subr.mxu0 0.0
        %705 = vmatpush1.msra.mxu0 0.0
        %706 = vmatprep.subr.mxu0 0.0
        %707 = vmatpush1.msra.mxu0 0.0
        %708 = vmatprep.subr.mxu0 0.0
        %709 = vmatpush1.msra.mxu0 0.0
        %710 = vmatprep.subr.mxu0 0.0
        %711 = vmatpush1.msra.mxu0 0.0
        %712 = vmatprep.subr.mxu0 0.0
        %713 = vmatpush1.msra.mxu0 0.0
        %714 = vmatprep.subr.mxu0 0.0
        %715 = vmatpush1.msra.mxu0 0.0
        %716 = vmatprep.subr.mxu0 0.0
        %717 = vmatpush1.msra.mxu0 0.0
        %718 = vmatprep.subr.mxu0 0.0
        %719 = vmatpush1.msra.mxu0 0.0
        %720 = vmatprep.subr.mxu0 0.0
        %721 = vmatpush1.msra.mxu0 0.0
        %722 = vmatprep.subr.mxu0 0.0
        %723 = vmatpush1.msra.mxu0 0.0
        %724 = vmatprep.subr.mxu0 0.0
        %725 = vmatpush1.msra.mxu0 0.0
        %726 = vmatprep.subr.mxu0 0.0
        %727 = vmatpush1.msra.mxu0 0.0
        %728 = vmatprep.subr.mxu0 %v621
        %729 = vmatpush1.msra.mxu0 %v620
        %730 = vmatprep.subr.mxu0 %v619
        %731 = vmatpush1.msra.mxu0 %v618
        %732 = vmatprep.subr.mxu0 %v617
        %733 = vmatpush1.msra.mxu0 %v616
        %734 = vmatprep.subr.mxu0 %v615
        %735 = vmatpush1.msra.mxu0 %v614
        %736 = vmatprep.subr.mxu0 0.0
        %737 = vmatpush2.msra.mxu0 0.0
        %738 = vmatprep.subr.mxu0 0.0
        %739 = vmatpush2.msra.mxu0 0.0
        %740 = vmatprep.subr.mxu0 0.0
        %741 = vmatpush2.msra.mxu0 0.0
        %742 = vmatprep.subr.mxu0 0.0
        %743 = vmatpush2.msra.mxu0 0.0
        %744 = vmatprep.subr.mxu0 0.0
        %745 = vmatpush2.msra.mxu0 0.0
        %746 = vmatprep.subr.mxu0 0.0
        %747 = vmatpush2.msra.mxu0 0.0
        %748 = vmatprep.subr.mxu0 0.0
        %749 = vmatpush2.msra.mxu0 0.0
        %750 = vmatprep.subr.mxu0 0.0
        %751 = vmatpush2.msra.mxu0 0.0
        %752 = vmatprep.subr.mxu0 0.0
        %753 = vmatpush2.msra.mxu0 0.0
        %754 = vmatprep.subr.mxu0 0.0
        %755 = vmatpush2.msra.mxu0 0.0
        %756 = vmatprep.subr.mxu0 0.0
        %757 = vmatpush2.msra.mxu0 0.0
        %758 = vmatprep.subr.mxu0 0.0
        %759 = vmatpush2.msra.mxu0 0.0
        %760 = vmatprep.subr.mxu0 0.0
        %761 = vmatpush2.msra.mxu0 0.0
        %762 = vmatprep.subr.mxu0 0.0
        %763 = vmatpush2.msra.mxu0 0.0
        %764 = vmatprep.subr.mxu0 0.0
        %765 = vmatpush2.msra.mxu0 0.0
        %766 = vmatprep.subr.mxu0 0.0
        %767 = vmatpush2.msra.mxu0 0.0
        %768 = vmatprep.mubr.f32.mxu0 0.0
        %769 = vmatmul.mubr.f32.gmra.mxu0 %v631
        %v770 = vpop.f32.mrf.mxu0
        %v771 = vadd.f32 %v627, %v770
        %v772 = vpop.f32.mrf.mxu0
        %v773 = vadd.f32 %v627, %v772
        %774 = vdwg.mxu0
        %v775 = vsub.f32 %v700, %v771
        %v776 = vsub.f32 %v702, %v773
        %v777 = vstv %s373
        %v778 = vmul.f32 %v775, %v777
        %v779 = vmul.f32 %v776, %v777
        %v780 = vadd.f32 %v771, %v778
        %v781 = vadd.f32 %v773, %v779
        %v782 = vstv %s398
        %v783 = vmul.f32 %v780, %v782
        %v784 = vmul.f32 %v781, %v782
        %v787 = vcombine.low %v783, %v784
        %v789 = vadd.f32 %v401, %v787
        %v790 = vsub.f32 %v401, %v789
        %v791 = vstv %s390
        %v792 = vrcp.pop %v791
        %v793 = vmul.f32 %v790, %v792
        %s794 = ssub.f32 %s392, %s390
        %v795 = vstv %s794
        %v796 = vmul.f32 %v793, %v795
        %v797 = vadd.f32 %v401, %v796
        %v798 = vld [vmem:[%s372] sm:$0xff]
        %v799 = vstv %s394
        %v800 = vmul.f32 %v798, %v799
        %v801 = vadd.f32 %v797, %v800
        %802 = vst [vmem:[#allocation2] sm:$0xff] %v801
        %v803 = vstv %s376
        %v804 = vmul.f32 %v801, %v803
        %805 = vst [vmem:[#allocation8] sm:$0xff] %v804
        // Predicated region
        $region73: #{tpu_custom_call.1} parent=59 // pred_check
          %p806 = pneg %p252
        $region74: #{tpu_custom_call.1} parent=59 // pred_check_branch
          %808 = sbr.rel (%p806) target = $region76
        $region75: #{tpu_custom_call.1} parent=59 // pred_region
          %s810 = ssub.s32 128, 128
          %811 = vsyncadd [#allocation4], %s810
          %s813 = sshll.u32 [#allocation8], 4
          %s814 = int_to_ptr.vmem [resolvable:$true] %s813
          %816 = dma.vmem_to_hbm [thread:$0]  %s814, 128, %s10, [#allocation4]
        $region76: #{tpu_custom_call.1} parent=59 // pred_fallthru
          _
        // Predicated region
        $region77: #{tpu_custom_call.1} parent=59 // pred_check
          %p817 = pneg %p252
        $region78: #{tpu_custom_call.1} parent=59 // pred_check_branch
          %819 = sbr.rel (%p817) target = $region80
        $region79: #{tpu_custom_call.1} parent=59 // pred_region
          %820 = dma.done [#allocation4], 128
        $region80: #{tpu_custom_call.1} parent=59 // pred_fallthru
          _
      $region60: #{tpu_custom_call.1} parent=5 // pred_fallthru
        _
      %p821 = scmp.le.s32.totalorder 2, %s19
      // Predicated region
      $region81: #{tpu_custom_call.1} parent=5 // pred_check
        %p822 = pneg %p821
      $region82: #{tpu_custom_call.1} parent=5 // pred_check_branch
        %824 = sbr.rel (%p822) target = $region84
      $region83: #{tpu_custom_call.1} parent=5 // pred_region
        %s825 = ssub.s32 %s19, 2
      $region84: #{tpu_custom_call.1} parent=5 // pred_fallthru
        _
    $region6: #{tpu_custom_call.1} parent=1 // loop_footer
      %s23 = sadd.s32 1, %s19
    $region7: #{tpu_custom_call.1} parent=1 // loop_footer_branch
      %18 = sbr.rel target = $region3
    $region8: #{tpu_custom_call.1} parent=1 // loop_exit
      _
    %826 = vsyncpa [#allocation4], 1
    %s827 = scalar_lea.sflag [#allocation4], 1
    %828 = vsyncpa %s827, 1
    %829 = vsyncpa [#allocation5], 1
    %s830 = scalar_lea.sflag [#allocation5], 1
    %831 = vsyncpa %s830, 1
    %832 = vsyncpa [#allocation7], 1

</llo_original>
